<compile_context>
chip_gen: v6e
topology: v6e:2x2x1
jax: 0.10.0
libtpu: 0.0.40
codegen_flags: <defaults>
</compile_context>

<pallas_src>
import math
import functools

import jax
import jax.numpy as jnp
from jax.experimental import pallas as pl
from jax.experimental.pallas import tpu as pltpu


def _mha_kernel(x_ref, wqkv_ref, wo_ref, o_ref, *,
                num_head, head_size, seq_len, batch_tile):
    """One grid step == one batch tile; all (batch, head) groups fused."""
    H, hs, L, TB = num_head, head_size, seq_len, batch_tile
    E = H * hs

    xt = x_ref[...]                                              # (TB*L, E) bf16

    # Fused Q/K/V projection: one lane-dense MXU pass over all tokens, f32 acc.
    qkv = jnp.dot(xt, wqkv_ref[...],
                  preferred_element_type=jnp.float32)            # (TB*L, 3E)
    qkv = qkv.astype(jnp.bfloat16)

    def gather_groups(m):
        # (TB*L, E) -> (TB*H, L, hs); static, aligned sublane/lane slices.
        return jnp.stack(
            [m[b * L:(b + 1) * L, h * hs:(h + 1) * hs]
             for b in range(TB) for h in range(H)],
            axis=0)

    q = gather_groups(qkv[:, :E])
    k = gather_groups(qkv[:, E:2 * E])
    v = gather_groups(qkv[:, 2 * E:])

    # Scaled dot-product attention, batched over (batch, head) groups.
    att = jnp.einsum('gld,gmd->glm', q, k,
                     preferred_element_type=jnp.float32)         # (G, L, L)
    att = att * (1.0 / math.sqrt(hs))

    # Causal mask with a large finite negative (avoids inf-inf NaN risk).
    row = jax.lax.broadcasted_iota(jnp.int32, (L, L), 0)
    col = jax.lax.broadcasted_iota(jnp.int32, (L, L), 1)
    att = jnp.where((col <= row)[None, :, :], att, -1e30)

    # Softmax in f32; reciprocal goes to the EUP slot instead of a VALU divide.
    att = att - jnp.max(att, axis=-1, keepdims=True)
    p = jnp.exp(att)
    p = p * pl.reciprocal(jnp.sum(p, axis=-1, keepdims=True), approx=True)

    # Per-group context, then re-assemble (TB*L, E) with heads on the lane axis.
    ctx = jnp.einsum('glm,gmd->gld', p.astype(jnp.bfloat16), v,
                     preferred_element_type=jnp.float32)         # (G, L, hs)
    rows = [jnp.concatenate([ctx[b * H + h] for h in range(H)], axis=-1)
            for b in range(TB)]                                  # TB x (L, E)
    concat = jnp.concatenate(rows, axis=0).astype(jnp.bfloat16)  # (TB*L, E)

    # Output projection (concat @ Wo.T): single MXU pass, f32 acc, one store.
    out = jnp.dot(concat, wo_ref[...],
                  preferred_element_type=jnp.float32)            # (TB*L, E)
    o_ref[...] = out.astype(o_ref.dtype)


def multi_head_attention(x, w_q, w_k, w_v, w_o, *,
                         num_head, head_size, batch_tile=None):
    """x: (B, L, E) float32.  w_*: (E, E) PyTorch-style Linear weights."""
    B, L, E = x.shape
    assert num_head * head_size == E

    # Whole batch in one step when small (working set is tiny); pick a smaller
    # batch_tile for large B to pipeline / shard the batch axis across cores.
    if batch_tile is None:
        batch_tile = B
    assert B % batch_tile == 0
    grid_b = B // batch_tile

    # Host-side layout glue (no compute): fuse q/k/v weights into one (E, 3E)
    # slab, pre-transpose Wo, cast matmul operands to bf16, flatten tokens.
    w_qkv = jnp.concatenate([w_q.T, w_k.T, w_v.T], axis=1).astype(jnp.bfloat16)  # (E, 3E)
    w_out = w_o.T.astype(jnp.bfloat16)                                           # (E, E)
    x2d = x.reshape(B * L, E).astype(jnp.bfloat16)                               # (B*L, E)

    kernel = functools.partial(
        _mha_kernel, num_head=num_head, head_size=head_size,
        seq_len=L, batch_tile=batch_tile)

    # NOTE: with E=32 the output lane dim (<128) lowers to masked stores; real
    # configs should keep E a multiple of 128 for lane-dense writeback.
    out = pl.pallas_call(
        kernel,
        out_shape=jax.ShapeDtypeStruct((B * L, E), jnp.float32),
        grid_spec=pltpu.PrefetchScalarGridSpec(
            num_scalar_prefetch=0,
            grid=(grid_b,),
            in_specs=[
                pl.BlockSpec((batch_tile * L, E), lambda b: (b, 0)),
                # Weights: full untiled blocks with a constant index_map ->
                # fetched once, VMEM-resident across all grid steps.
                pl.BlockSpec((E, 3 * E), lambda b: (0, 0)),
                pl.BlockSpec((E, E), lambda b: (0, 0)),
            ],
            out_specs=pl.BlockSpec((batch_tile * L, E), lambda b: (b, 0)),
        ),
        compiler_params=pltpu.CompilerParams(
            dimension_semantics=("parallel",),   # batch-tile axis feeds both TCs on v7x
        ),
    )(x2d, w_qkv, w_out)
    return out.reshape(B, L, E)


def _reference(x, w_q, w_k, w_v, w_o, *, num_head, head_size):
    """Pure-JAX f32 reference mirroring the PyTorch forward (eval mode)."""
    B, L, E = x.shape
    query = (x @ w_q.T).reshape(B, L, num_head, head_size)
    key = (x @ w_k.T).reshape(B, L, num_head, head_size)
    value = (x @ w_v.T).reshape(B, L, num_head, head_size)
    tril = jnp.tril(jnp.ones((L, L)))
    outs = []
    for h in range(num_head):
        q = query[:, :, h, :]
        k = key[:, :, h, :]
        v = value[:, :, h, :]
        att = (q @ jnp.swapaxes(k, -2, -1)) / math.sqrt(head_size)
        att = jnp.where(tril == 0, -jnp.inf, att)
        p = jax.nn.softmax(att, axis=-1)
        outs.append(p @ v)
    out = jnp.concatenate(outs, axis=-1)
    return out @ w_o.T


if __name__ == "__main__":
    # Small config consistent with the module:
    # batch_size=2, prefill_size=8, embedding_dim=32, num_head=4, head_size=8
    B, L, E = 2, 8, 32
    num_head, head_size = 4, 8

    key = jax.random.PRNGKey(0)
    kx, kq, kk, kv, ko = jax.random.split(key, 5)
    x = jax.random.normal(kx, (B, L, E), dtype=jnp.float32)
    scale = 1.0 / math.sqrt(E)
    w_q = jax.random.uniform(kq, (E, E), jnp.float32, -scale, scale)
    w_k = jax.random.uniform(kk, (E, E), jnp.float32, -scale, scale)
    w_v = jax.random.uniform(kv, (E, E), jnp.float32, -scale, scale)
    w_o = jax.random.uniform(ko, (E, E), jnp.float32, -scale, scale)

    out = multi_head_attention(
        x, w_q, w_k, w_v, w_o, num_head=num_head, head_size=head_size
    )
    out = jax.block_until_ready(out)

    ref = _reference(x, w_q, w_k, w_v, w_o, num_head=num_head, head_size=head_size)
    assert out.shape == (B, L, E)
    # bf16 matmul operands + approx reciprocal -> compare at bf16 tolerance.
    err = jnp.max(jnp.abs(out - ref))
    assert jnp.allclose(out, ref, atol=5e-2, rtol=5e-2), \
        f"mismatch vs reference, max abs err={err}"

    print("KERNEL_OK")
</pallas_src>

<mosaic_0001>
module attributes {stable_mosaic.version = 11 : i64} {
  func.func @_mha_kernel(%arg0: i32, %arg1: memref<16x32xbf16, #tpu.memory_space<vmem>>, %arg2: memref<32x96xbf16, #tpu.memory_space<vmem>>, %arg3: memref<32x32xbf16, #tpu.memory_space<vmem>>, %arg4: memref<16x32xf32, #tpu.memory_space<vmem>>) attributes {dimension_semantics = [#tpu.dimension_semantics<parallel>], iteration_bounds = array<i64: 1>, scalar_prefetch = 0 : i64, scratch_operands = 0 : i64, tpu.core_type = #tpu.core_type<tc>, window_params = [{transform_indices = @transform_0, window_bounds = array<i64: 16, 32>}, {pipeline_mode = #tpu.pipeline_mode<synchronous>, transform_indices = @transform_1, window_bounds = array<i64: 32, 96>}, {pipeline_mode = #tpu.pipeline_mode<synchronous>, transform_indices = @transform_2, window_bounds = array<i64: 32, 32>}, {transform_indices = @transform_3, window_bounds = array<i64: 16, 32>}]} {
    %c0 = arith.constant 0 : index
    %c0_0 = arith.constant 0 : index
    %0 = vector.load %arg1[%c0, %c0_0] : memref<16x32xbf16, #tpu.memory_space<vmem>>, vector<16x32xbf16>
    %c0_1 = arith.constant 0 : index
    %c0_2 = arith.constant 0 : index
    %1 = vector.load %arg2[%c0_1, %c0_2] : memref<32x96xbf16, #tpu.memory_space<vmem>>, vector<32x96xbf16>
    %cst = arith.constant dense<0.000000e+00> : vector<16x96xf32>
    %2 = tpu.matmul %0, %1, %cst {dimension_numbers = #tpu.dot_dimension_numbers<[1], [0], [0], [1], [0, 0, 1, 1], [], []>} : vector<16x32xbf16>, vector<32x96xbf16>, vector<16x96xf32> -> vector<16x96xf32>
    %3 = arith.truncf %2 : vector<16x96xf32> to vector<16x96xbf16>
    %4 = vector.extract_strided_slice %3 {offsets = [0, 0], sizes = [16, 32], strides = [1, 1]} : vector<16x96xbf16> to vector<16x32xbf16>
    %5 = vector.extract_strided_slice %4 {offsets = [0, 0], sizes = [8, 8], strides = [1, 1]} : vector<16x32xbf16> to vector<8x8xbf16>
    %6 = vector.extract_strided_slice %4 {offsets = [0, 8], sizes = [8, 8], strides = [1, 1]} : vector<16x32xbf16> to vector<8x8xbf16>
    %7 = vector.extract_strided_slice %4 {offsets = [0, 16], sizes = [8, 8], strides = [1, 1]} : vector<16x32xbf16> to vector<8x8xbf16>
    %8 = vector.extract_strided_slice %4 {offsets = [0, 24], sizes = [8, 8], strides = [1, 1]} : vector<16x32xbf16> to vector<8x8xbf16>
    %9 = vector.extract_strided_slice %4 {offsets = [8, 0], sizes = [8, 8], strides = [1, 1]} : vector<16x32xbf16> to vector<8x8xbf16>
    %10 = vector.extract_strided_slice %4 {offsets = [8, 8], sizes = [8, 8], strides = [1, 1]} : vector<16x32xbf16> to vector<8x8xbf16>
    %11 = vector.extract_strided_slice %4 {offsets = [8, 16], sizes = [8, 8], strides = [1, 1]} : vector<16x32xbf16> to vector<8x8xbf16>
    %12 = vector.extract_strided_slice %4 {offsets = [8, 24], sizes = [8, 8], strides = [1, 1]} : vector<16x32xbf16> to vector<8x8xbf16>
    %13 = vector.shape_cast %5 : vector<8x8xbf16> to vector<1x8x8xbf16>
    %14 = vector.shape_cast %6 : vector<8x8xbf16> to vector<1x8x8xbf16>
    %15 = vector.shape_cast %7 : vector<8x8xbf16> to vector<1x8x8xbf16>
    %16 = vector.shape_cast %8 : vector<8x8xbf16> to vector<1x8x8xbf16>
    %17 = vector.shape_cast %9 : vector<8x8xbf16> to vector<1x8x8xbf16>
    %18 = vector.shape_cast %10 : vector<8x8xbf16> to vector<1x8x8xbf16>
    %19 = vector.shape_cast %11 : vector<8x8xbf16> to vector<1x8x8xbf16>
    %20 = vector.shape_cast %12 : vector<8x8xbf16> to vector<1x8x8xbf16>
    %21 = tpu.concatenate %13, %14, %15, %16, %17, %18, %19, %20 in 0 : vector<1x8x8xbf16>, vector<1x8x8xbf16>, vector<1x8x8xbf16>, vector<1x8x8xbf16>, vector<1x8x8xbf16>, vector<1x8x8xbf16>, vector<1x8x8xbf16>, vector<1x8x8xbf16> -> vector<8x8x8xbf16>
    %22 = vector.extract_strided_slice %3 {offsets = [0, 32], sizes = [16, 32], strides = [1, 1]} : vector<16x96xbf16> to vector<16x32xbf16>
    %23 = vector.extract_strided_slice %22 {offsets = [0, 0], sizes = [8, 8], strides = [1, 1]} : vector<16x32xbf16> to vector<8x8xbf16>
    %24 = vector.extract_strided_slice %22 {offsets = [0, 8], sizes = [8, 8], strides = [1, 1]} : vector<16x32xbf16> to vector<8x8xbf16>
    %25 = vector.extract_strided_slice %22 {offsets = [0, 16], sizes = [8, 8], strides = [1, 1]} : vector<16x32xbf16> to vector<8x8xbf16>
    %26 = vector.extract_strided_slice %22 {offsets = [0, 24], sizes = [8, 8], strides = [1, 1]} : vector<16x32xbf16> to vector<8x8xbf16>
    %27 = vector.extract_strided_slice %22 {offsets = [8, 0], sizes = [8, 8], strides = [1, 1]} : vector<16x32xbf16> to vector<8x8xbf16>
    %28 = vector.extract_strided_slice %22 {offsets = [8, 8], sizes = [8, 8], strides = [1, 1]} : vector<16x32xbf16> to vector<8x8xbf16>
    %29 = vector.extract_strided_slice %22 {offsets = [8, 16], sizes = [8, 8], strides = [1, 1]} : vector<16x32xbf16> to vector<8x8xbf16>
    %30 = vector.extract_strided_slice %22 {offsets = [8, 24], sizes = [8, 8], strides = [1, 1]} : vector<16x32xbf16> to vector<8x8xbf16>
    %31 = vector.shape_cast %23 : vector<8x8xbf16> to vector<1x8x8xbf16>
    %32 = vector.shape_cast %24 : vector<8x8xbf16> to vector<1x8x8xbf16>
    %33 = vector.shape_cast %25 : vector<8x8xbf16> to vector<1x8x8xbf16>
    %34 = vector.shape_cast %26 : vector<8x8xbf16> to vector<1x8x8xbf16>
    %35 = vector.shape_cast %27 : vector<8x8xbf16> to vector<1x8x8xbf16>
    %36 = vector.shape_cast %28 : vector<8x8xbf16> to vector<1x8x8xbf16>
    %37 = vector.shape_cast %29 : vector<8x8xbf16> to vector<1x8x8xbf16>
    %38 = vector.shape_cast %30 : vector<8x8xbf16> to vector<1x8x8xbf16>
    %39 = tpu.concatenate %31, %32, %33, %34, %35, %36, %37, %38 in 0 : vector<1x8x8xbf16>, vector<1x8x8xbf16>, vector<1x8x8xbf16>, vector<1x8x8xbf16>, vector<1x8x8xbf16>, vector<1x8x8xbf16>, vector<1x8x8xbf16>, vector<1x8x8xbf16> -> vector<8x8x8xbf16>
    %40 = vector.extract_strided_slice %3 {offsets = [0, 64], sizes = [16, 32], strides = [1, 1]} : vector<16x96xbf16> to vector<16x32xbf16>
    %41 = vector.extract_strided_slice %40 {offsets = [0, 0], sizes = [8, 8], strides = [1, 1]} : vector<16x32xbf16> to vector<8x8xbf16>
    %42 = vector.extract_strided_slice %40 {offsets = [0, 8], sizes = [8, 8], strides = [1, 1]} : vector<16x32xbf16> to vector<8x8xbf16>
    %43 = vector.extract_strided_slice %40 {offsets = [0, 16], sizes = [8, 8], strides = [1, 1]} : vector<16x32xbf16> to vector<8x8xbf16>
    %44 = vector.extract_strided_slice %40 {offsets = [0, 24], sizes = [8, 8], strides = [1, 1]} : vector<16x32xbf16> to vector<8x8xbf16>
    %45 = vector.extract_strided_slice %40 {offsets = [8, 0], sizes = [8, 8], strides = [1, 1]} : vector<16x32xbf16> to vector<8x8xbf16>
    %46 = vector.extract_strided_slice %40 {offsets = [8, 8], sizes = [8, 8], strides = [1, 1]} : vector<16x32xbf16> to vector<8x8xbf16>
    %47 = vector.extract_strided_slice %40 {offsets = [8, 16], sizes = [8, 8], strides = [1, 1]} : vector<16x32xbf16> to vector<8x8xbf16>
    %48 = vector.extract_strided_slice %40 {offsets = [8, 24], sizes = [8, 8], strides = [1, 1]} : vector<16x32xbf16> to vector<8x8xbf16>
    %49 = vector.shape_cast %41 : vector<8x8xbf16> to vector<1x8x8xbf16>
    %50 = vector.shape_cast %42 : vector<8x8xbf16> to vector<1x8x8xbf16>
    %51 = vector.shape_cast %43 : vector<8x8xbf16> to vector<1x8x8xbf16>
    %52 = vector.shape_cast %44 : vector<8x8xbf16> to vector<1x8x8xbf16>
    %53 = vector.shape_cast %45 : vector<8x8xbf16> to vector<1x8x8xbf16>
    %54 = vector.shape_cast %46 : vector<8x8xbf16> to vector<1x8x8xbf16>
    %55 = vector.shape_cast %47 : vector<8x8xbf16> to vector<1x8x8xbf16>
    %56 = vector.shape_cast %48 : vector<8x8xbf16> to vector<1x8x8xbf16>
    %57 = tpu.concatenate %49, %50, %51, %52, %53, %54, %55, %56 in 0 : vector<1x8x8xbf16>, vector<1x8x8xbf16>, vector<1x8x8xbf16>, vector<1x8x8xbf16>, vector<1x8x8xbf16>, vector<1x8x8xbf16>, vector<1x8x8xbf16>, vector<1x8x8xbf16> -> vector<8x8x8xbf16>
    "tpu.trace_start"() <{level = 10 : i32, message = "gld,gmd->glm"}> : () -> ()
    %cst_3 = arith.constant dense<0.000000e+00> : vector<8x8x8xf32>
    %58 = tpu.matmul %21, %39, %cst_3 {dimension_numbers = #tpu.dot_dimension_numbers<[2], [2], [1], [1], [0, 0, 0, 1, 1, 1], [0], [0]>} : vector<8x8x8xbf16>, vector<8x8x8xbf16>, vector<8x8x8xf32> -> vector<8x8x8xf32>
    "tpu.trace_stop"() : () -> ()
    %cst_4 = arith.constant 0.353553385 : f32
    %59 = vector.broadcast %cst_4 : f32 to vector<8x8x8xf32>
    %60 = arith.mulf %58, %59 : vector<8x8x8xf32>
    %61 = tpu.iota {dimensions = array<i32: 0>} : vector<8x8xi32>
    %62 = tpu.iota {dimensions = array<i32: 1>} : vector<8x8xi32>
    %63 = arith.cmpi sle, %62, %61 : vector<8x8xi32>
    %64 = vector.shape_cast %63 : vector<8x8xi1> to vector<1x8x8xi1>
    %cst_5 = arith.constant -1.000000e+30 : f32
    %65 = vector.shape_cast %64 : vector<1x8x8xi1> to vector<1x8x8xi1>
    %66 = vector.broadcast %65 : vector<1x8x8xi1> to vector<8x8x8xi1>
    %67 = vector.broadcast %cst_5 : f32 to vector<8x8x8xf32>
    %68 = arith.select %66, %60, %67 : vector<8x8x8xi1>, vector<8x8x8xf32>
    %cst_6 = arith.constant dense<0xFF800000> : vector<8x8xf32>
    %69 = vector.multi_reduction <maximumf>, %68, %cst_6 [2] : vector<8x8x8xf32> to vector<8x8xf32>
    %70 = vector.shape_cast %69 : vector<8x8xf32> to vector<8x8x1xf32>
    %71 = vector.broadcast %70 : vector<8x8x1xf32> to vector<8x8x8xf32>
    %72 = arith.subf %68, %71 : vector<8x8x8xf32>
    %73 = math.exp %72 : vector<8x8x8xf32>
    %cst_7 = arith.constant dense<0.000000e+00> : vector<8x8xf32>
    %74 = vector.multi_reduction <add>, %73, %cst_7 [2] : vector<8x8x8xf32> to vector<8x8xf32>
    %75 = vector.shape_cast %74 : vector<8x8xf32> to vector<8x8x1xf32>
    %76 = tpu.reciprocal %75 {approx = true} : vector<8x8x1xf32> -> vector<8x8x1xf32>
    %77 = vector.broadcast %76 : vector<8x8x1xf32> to vector<8x8x8xf32>
    %78 = arith.mulf %73, %77 : vector<8x8x8xf32>
    %79 = arith.truncf %78 : vector<8x8x8xf32> to vector<8x8x8xbf16>
    "tpu.trace_start"() <{level = 10 : i32, message = "glm,gmd->gld"}> : () -> ()
    %cst_8 = arith.constant dense<0.000000e+00> : vector<8x8x8xf32>
    %80 = tpu.matmul %79, %57, %cst_8 {dimension_numbers = #tpu.dot_dimension_numbers<[2], [1], [1], [2], [0, 0, 0, 1, 1, 2], [0], [0]>} : vector<8x8x8xbf16>, vector<8x8x8xbf16>, vector<8x8x8xf32> -> vector<8x8x8xf32>
    "tpu.trace_stop"() : () -> ()
    %81 = vector.extract_strided_slice %80 {offsets = [0, 0, 0], sizes = [1, 8, 8], strides = [1, 1, 1]} : vector<8x8x8xf32> to vector<1x8x8xf32>
    %82 = vector.shape_cast %81 : vector<1x8x8xf32> to vector<8x8xf32>
    %83 = vector.extract_strided_slice %80 {offsets = [1, 0, 0], sizes = [1, 8, 8], strides = [1, 1, 1]} : vector<8x8x8xf32> to vector<1x8x8xf32>
    %84 = vector.shape_cast %83 : vector<1x8x8xf32> to vector<8x8xf32>
    %85 = vector.extract_strided_slice %80 {offsets = [2, 0, 0], sizes = [1, 8, 8], strides = [1, 1, 1]} : vector<8x8x8xf32> to vector<1x8x8xf32>
    %86 = vector.shape_cast %85 : vector<1x8x8xf32> to vector<8x8xf32>
    %87 = vector.extract_strided_slice %80 {offsets = [3, 0, 0], sizes = [1, 8, 8], strides = [1, 1, 1]} : vector<8x8x8xf32> to vector<1x8x8xf32>
    %88 = vector.shape_cast %87 : vector<1x8x8xf32> to vector<8x8xf32>
    %89 = tpu.concatenate %82, %84, %86, %88 in 1 : vector<8x8xf32>, vector<8x8xf32>, vector<8x8xf32>, vector<8x8xf32> -> vector<8x32xf32>
    %90 = vector.extract_strided_slice %80 {offsets = [4, 0, 0], sizes = [1, 8, 8], strides = [1, 1, 1]} : vector<8x8x8xf32> to vector<1x8x8xf32>
    %91 = vector.shape_cast %90 : vector<1x8x8xf32> to vector<8x8xf32>
    %92 = vector.extract_strided_slice %80 {offsets = [5, 0, 0], sizes = [1, 8, 8], strides = [1, 1, 1]} : vector<8x8x8xf32> to vector<1x8x8xf32>
    %93 = vector.shape_cast %92 : vector<1x8x8xf32> to vector<8x8xf32>
    %94 = vector.extract_strided_slice %80 {offsets = [6, 0, 0], sizes = [1, 8, 8], strides = [1, 1, 1]} : vector<8x8x8xf32> to vector<1x8x8xf32>
    %95 = vector.shape_cast %94 : vector<1x8x8xf32> to vector<8x8xf32>
    %96 = vector.extract_strided_slice %80 {offsets = [7, 0, 0], sizes = [1, 8, 8], strides = [1, 1, 1]} : vector<8x8x8xf32> to vector<1x8x8xf32>
    %97 = vector.shape_cast %96 : vector<1x8x8xf32> to vector<8x8xf32>
    %98 = tpu.concatenate %91, %93, %95, %97 in 1 : vector<8x8xf32>, vector<8x8xf32>, vector<8x8xf32>, vector<8x8xf32> -> vector<8x32xf32>
    %99 = tpu.concatenate %89, %98 in 0 : vector<8x32xf32>, vector<8x32xf32> -> vector<16x32xf32>
    %100 = arith.truncf %99 : vector<16x32xf32> to vector<16x32xbf16>
    %c0_9 = arith.constant 0 : index
    %c0_10 = arith.constant 0 : index
    %101 = vector.load %arg3[%c0_9, %c0_10] : memref<32x32xbf16, #tpu.memory_space<vmem>>, vector<32x32xbf16>
    %cst_11 = arith.constant dense<0.000000e+00> : vector<16x32xf32>
    %102 = tpu.matmul %100, %101, %cst_11 {dimension_numbers = #tpu.dot_dimension_numbers<[1], [0], [0], [1], [0, 0, 1, 1], [], []>} : vector<16x32xbf16>, vector<32x32xbf16>, vector<16x32xf32> -> vector<16x32xf32>
    %c0_12 = arith.constant 0 : index
    %c0_13 = arith.constant 0 : index
    %103 = vector.load %arg4[%c0_12, %c0_13] : memref<16x32xf32, #tpu.memory_space<vmem>>, vector<16x32xf32>
    tpu.vector_store %arg4[%c0_12, %c0_13], %102 {strides = array<i32>} : memref<16x32xf32, #tpu.memory_space<vmem>>, vector<16x32xf32>,
    return
  }
  func.func @transform_0(%arg0: i32) -> (i32, i32) {
    %c0_i32 = arith.constant 0 : i32
    %c0_i32_0 = arith.constant 0 : i32
    return %arg0, %c0_i32 : i32, i32
  }
  func.func @transform_1(%arg0: i32) -> (i32, i32) {
    %c0_i32 = arith.constant 0 : i32
    %c0_i32_0 = arith.constant 0 : i32
    %c0_i32_1 = arith.constant 0 : i32
    return %c0_i32, %c0_i32_0 : i32, i32
  }
  func.func @transform_2(%arg0: i32) -> (i32, i32) {
    %c0_i32 = arith.constant 0 : i32
    %c0_i32_0 = arith.constant 0 : i32
    %c0_i32_1 = arith.constant 0 : i32
    return %c0_i32, %c0_i32_0 : i32, i32
  }
  func.func @transform_3(%arg0: i32) -> (i32, i32) {
    %c0_i32 = arith.constant 0 : i32
    %c0_i32_0 = arith.constant 0 : i32
    return %arg0, %c0_i32 : i32, i32
  }
}

</mosaic_0001>

<llo_original>
// kernel: tpu_custom_call.1
$region0: #{tpu_custom_call.1}
  #allocation0 [shape = 'u32[]', space=smem, size = 0x4, offset = 0x4, fixed_abs, tag = 'smem constant byte address 0x4 - core index']
  #allocation1 [shape = 'u32[144,128]{1,0:T(1,128)}', space=vmem, size = 0x12000, scoped, tag = 'internal scratch']
  %s0 = inlined_call_operand.hbm [shape: bf16[16,32], index: 0, kind: input, shape index: {}]
  %s1 = inlined_call_operand.hbm [shape: bf16[32,96], index: 1, kind: input, shape index: {}]
  %s2 = inlined_call_operand.hbm [shape: bf16[32,32], index: 2, kind: input, shape index: {}]
  %s3 = inlined_call_operand.hbm [shape: f32[16,32], index: 3, kind: output, shape index: {}]
  %s4 = sld [smem:[#allocation0]]
  $region34: #{tpu_custom_call.1} parent=0
    _
  %s6 = ssub.s32 1, %s4
  %s7 = scalar_select 0, %s6, %s4
  $region1: #{tpu_custom_call.1} parent=0
    #allocation2 [shape = 'u8[4096]{0}', space=vmem, size = 0x1000, scoped, tag = 'input window, operand 0, single buffered']
    #allocation3 [shape = 's32[1]{0}', space=sflag, size = 0x4, scoped, tag = 'scoped memory for tpu_custom_call.1']
    #allocation4 [shape = 's32[1]{0}', space=sflag, size = 0x4, scoped, tag = 'scoped memory for tpu_custom_call.1']
    #allocation5 [shape = 'u8[8192]{0}', space=vmem, size = 0x2000, scoped, tag = 'input window, operand 1, single buffered']
    #allocation6 [shape = 's32[1]{0}', space=sflag, size = 0x4, scoped, tag = 'scoped memory for tpu_custom_call.1']
    #allocation7 [shape = 'u8[8192]{0}', space=vmem, size = 0x2000, scoped, tag = 'input window, operand 2, single buffered']
    #allocation8 [shape = 'u8[8192]{0}', space=vmem, size = 0x2000, scoped, tag = 'output window, operand 0, single buffered']
    %8 = vsyncpa [#allocation3], 0
    %9 = vsyncpa [#allocation6], 0
    %10 = vsyncpa [#allocation4], 0
    // Predicated region
    $region2: #{tpu_custom_call.1} parent=1 // pred_check
      _
    $region3: #{tpu_custom_call.1} parent=1 // pred_check_branch
      %12 = sbr.rel (0) target = $region5
    $region4: #{tpu_custom_call.1} parent=1 // pred_region
      %s14 = ssub.s32 128, 128
      %15 = vsyncadd [#allocation3], %s14
      %s16 = sshll.u32 [#allocation2], 4
      %s17 = int_to_ptr.vmem [resolvable:$true] %s16
      %22 = dma.hbm_to_vmem [thread:$0]  %s0, 128, %s17, [#allocation3], 64, 64, 4
    $region5: #{tpu_custom_call.1} parent=1 // pred_fallthru
      _
    // Predicated region
    $region6: #{tpu_custom_call.1} parent=1 // pred_check
      _
    $region7: #{tpu_custom_call.1} parent=1 // pred_check_branch
      %24 = sbr.rel (0) target = $region9
    $region8: #{tpu_custom_call.1} parent=1 // pred_region
      %s26 = ssub.s32 256, 256
      %27 = vsyncadd [#allocation6], %s26
      %s28 = sshll.u32 [#allocation5], 4
      %s29 = int_to_ptr.vmem [resolvable:$true] %s28
      %34 = dma.hbm_to_vmem [thread:$0]  %s1, 256, %s29, [#allocation6], 64, 64, 4
    $region9: #{tpu_custom_call.1} parent=1 // pred_fallthru
      _
    // Predicated region
    $region10: #{tpu_custom_call.1} parent=1 // pred_check
      _
    $region11: #{tpu_custom_call.1} parent=1 // pred_check_branch
      %36 = sbr.rel (0) target = $region13
    $region12: #{tpu_custom_call.1} parent=1 // pred_region
      %s38 = ssub.s32 256, 256
      %39 = vsyncadd [#allocation6], %s38
      %s40 = sshll.u32 [#allocation7], 4
      %s41 = int_to_ptr.vmem [resolvable:$true] %s40
      %46 = dma.hbm_to_vmem [thread:$0]  %s2, 256, %s41, [#allocation6], 64, 64, 4
    $region13: #{tpu_custom_call.1} parent=1 // pred_fallthru
      _
    // Predicated region
    $region14: #{tpu_custom_call.1} parent=1 // pred_check
      _
    $region15: #{tpu_custom_call.1} parent=1 // pred_check_branch
      %48 = sbr.rel (0) target = $region17
    $region16: #{tpu_custom_call.1} parent=1 // pred_region
      %49 = dma.done [#allocation3], 128
    $region17: #{tpu_custom_call.1} parent=1 // pred_fallthru
      _
    // Predicated region
    $region18: #{tpu_custom_call.1} parent=1 // pred_check
      _
    $region19: #{tpu_custom_call.1} parent=1 // pred_check_branch
      %51 = sbr.rel (0) target = $region21
    $region20: #{tpu_custom_call.1} parent=1 // pred_region
      %52 = dma.done [#allocation6], 256
    $region21: #{tpu_custom_call.1} parent=1 // pred_fallthru
      _
    // Predicated region
    $region22: #{tpu_custom_call.1} parent=1 // pred_check
      _
    $region23: #{tpu_custom_call.1} parent=1 // pred_check_branch
      %54 = sbr.rel (0) target = $region25
    $region24: #{tpu_custom_call.1} parent=1 // pred_region
      %55 = dma.done [#allocation6], 256
    $region25: #{tpu_custom_call.1} parent=1 // pred_fallthru
      _
    %v57 = vld [vmem:[#allocation2] sm:$0xf]
    %v58 = vld [vmem:[#allocation2 + $0x4] sm:$0xf]
    %v59 = vld [vmem:[#allocation5] sm:$0xf]
    %v60 = vld [vmem:[#allocation5 + $0x4] sm:$0xf]
    %v61 = vld [vmem:[#allocation5 + $0x8] sm:$0xf]
    %v62 = vld [vmem:[#allocation5 + $0xc] sm:$0xf]
    %v65 = vunpack.c.l.b16 %v57
    %v66 = vunpack.c.l.b16 %v58
    %v67 = vpack.c.b16 %v66, %v65
    %v72 = vunpack.c.l.b16 %v59
    %v73 = vunpack.c.l.b16 %v60
    %v74 = vunpack.c.l.b16 %v61
    %v75 = vunpack.c.l.b16 %v62
    %v76 = vpack.c.b16 %v73, %v72
    %v77 = vpack.c.b16 %v75, %v74
    %vm80 = vcmask 261120
    %v82 = vsel %vm80, %v67, 0
    %84 = vmatprep.subr.bf16.mxu0 0
    %85 = vmatpush1.bf16.msra.mxu0 0
    %86 = vmatprep.subr.bf16.mxu0 0
    %87 = vmatpush1.bf16.msra.mxu0 0
    %88 = vmatprep.subr.bf16.mxu0 0
    %89 = vmatpush1.bf16.msra.mxu0 0
    %90 = vmatprep.subr.bf16.mxu0 0
    %91 = vmatpush1.bf16.msra.mxu0 0
    %92 = vmatprep.subr.bf16.mxu0 0
    %93 = vmatpush1.bf16.msra.mxu0 0
    %94 = vmatprep.subr.bf16.mxu0 0
    %95 = vmatpush1.bf16.msra.mxu0 0
    %96 = vmatprep.subr.bf16.mxu0 0
    %97 = vmatpush1.bf16.msra.mxu0 %v77
    %98 = vmatprep.subr.bf16.mxu0 0
    %99 = vmatpush1.bf16.msra.mxu0 %v76
    %100 = vmatprep.subr.bf16.mxu0 0
    %101 = vmatpush2.bf16.msra.mxu0 0
    %102 = vmatprep.subr.bf16.mxu0 0
    %103 = vmatpush2.bf16.msra.mxu0 0
    %104 = vmatprep.subr.bf16.mxu0 0
    %105 = vmatpush2.bf16.msra.mxu0 0
    %106 = vmatprep.subr.bf16.mxu0 0
    %107 = vmatpush2.bf16.msra.mxu0 0
    %108 = vmatprep.subr.bf16.mxu0 0
    %109 = vmatpush2.bf16.msra.mxu0 0
    %110 = vmatprep.subr.bf16.mxu0 0
    %111 = vmatpush2.bf16.msra.mxu0 0
    %112 = vmatprep.subr.bf16.mxu0 0
    %113 = vmatpush2.bf16.msra.mxu0 0
    %114 = vmatprep.subr.bf16.mxu0 0
    %115 = vmatpush2.bf16.msra.mxu0 0
    %116 = vmatprep.mubr.bf16.mxu0 0
    %117 = vmatmul.mubr.bf16.gmra.mxu0 %v82
    %v118 = vpop.f32.mrf.mxu0
    %v119 = vadd.f32 0.0, %v118
    %v120 = vpop.f32.mrf.mxu0
    %v121 = vpop.f32.mrf.mxu0
    %v122 = vadd.f32 0.0, %v121
    %v123 = vpop.f32.mrf.mxu0
    %124 = vdwg.mxu0
    %v125 = vpack.c.bf16 %v122, %v119
    %127 = vrot.lane.b32.xlu0 %v125, 120
    %v128 = vpop.permute.xlu0 %127
    %129 = vrot.lane.b32.xlu0 %v125, 112
    %v130 = vpop.permute.xlu0 %129
    %131 = vrot.lane.b32.xlu0 %v125, 104
    %v132 = vpop.permute.xlu0 %131
    %v133 = vrot.slane %v125, 4
    %134 = vrot.lane.b32.xlu0 %v133, 120
    %v135 = vpop.permute.xlu0 %134
    %136 = vrot.lane.b32.xlu0 %v133, 112
    %v137 = vpop.permute.xlu0 %136
    %138 = vrot.lane.b32.xlu0 %v133, 104
    %v139 = vpop.permute.xlu0 %138
    %140 = vrot.lane.b32.xlu0 %v125, 96
    %v141 = vpop.permute.xlu0 %140
    %vm142 = vcmask 64512
    %v144 = vsel %vm142, %v125, 0
    %v147 = vsel %vm142, %v141, 0
    %149 = vmatprep.subr.bf16.mxu0 0
    %150 = vmatpush1.bf16.xpose.msra.mxu0 0
    %151 = vmatprep.subr.bf16.mxu0 0
    %152 = vmatpush1.bf16.xpose.msra.mxu0 0
    %153 = vmatprep.subr.bf16.mxu0 0
    %154 = vmatpush1.bf16.xpose.msra.mxu0 0
    %155 = vmatprep.subr.bf16.mxu0 0
    %156 = vmatpush1.bf16.xpose.msra.mxu0 0
    %157 = vmatprep.subr.bf16.mxu0 0
    %158 = vmatpush1.bf16.xpose.msra.mxu0 0
    %159 = vmatprep.subr.bf16.mxu0 0
    %160 = vmatpush1.bf16.xpose.msra.mxu0 0
    %161 = vmatprep.subr.bf16.mxu0 0
    %162 = vmatpush1.bf16.xpose.msra.mxu0 0
    %163 = vmatprep.subr.bf16.mxu0 0
    %164 = vmatpush1.bf16.xpose.msra.mxu0 %v147
    %165 = vmatprep.subr.bf16.mxu0 0
    %166 = vmatpush2.bf16.xpose.msra.mxu0 0
    %167 = vmatprep.subr.bf16.mxu0 0
    %168 = vmatpush2.bf16.xpose.msra.mxu0 0
    %169 = vmatprep.subr.bf16.mxu0 0
    %170 = vmatpush2.bf16.xpose.msra.mxu0 0
    %171 = vmatprep.subr.bf16.mxu0 0
    %172 = vmatpush2.bf16.xpose.msra.mxu0 0
    %173 = vmatprep.subr.bf16.mxu0 0
    %174 = vmatpush2.bf16.xpose.msra.mxu0 0
    %175 = vmatprep.subr.bf16.mxu0 0
    %176 = vmatpush2.bf16.xpose.msra.mxu0 0
    %177 = vmatprep.subr.bf16.mxu0 0
    %178 = vmatpush2.bf16.xpose.msra.mxu0 0
    %179 = vmatprep.subr.bf16.mxu0 0
    %180 = vmatpush2.bf16.xpose.msra.mxu0 0
    %181 = vmatprep.mubr.bf16.mxu0 0
    %182 = vmatmul.mubr.bf16.gmra.mxu0 %v144
    %v183 = vpop.f32.mrf.mxu0
    %v184 = vadd.f32 0.0, %v183
    %v185 = vpop.f32.mrf.mxu0
    %v186 = vpop.f32.mrf.mxu0
    %v187 = vpop.f32.mrf.mxu0
    %188 = vdwg.mxu0
    %189 = vrot.lane.b32.xlu0 %v128, 96
    %v190 = vpop.permute.xlu0 %189
    %v192 = vsel %vm142, %v128, 0
    %v195 = vsel %vm142, %v190, 0
    %197 = vmatprep.subr.bf16.mxu0 0
    %198 = vmatpush1.bf16.xpose.msra.mxu0 0
    %199 = vmatprep.subr.bf16.mxu0 0
    %200 = vmatpush1.bf16.xpose.msra.mxu0 0
    %201 = vmatprep.subr.bf16.mxu0 0
    %202 = vmatpush1.bf16.xpose.msra.mxu0 0
    %203 = vmatprep.subr.bf16.mxu0 0
    %204 = vmatpush1.bf16.xpose.msra.mxu0 0
    %205 = vmatprep.subr.bf16.mxu0 0
    %206 = vmatpush1.bf16.xpose.msra.mxu0 0
    %207 = vmatprep.subr.bf16.mxu0 0
    %208 = vmatpush1.bf16.xpose.msra.mxu0 0
    %209 = vmatprep.subr.bf16.mxu0 0
    %210 = vmatpush1.bf16.xpose.msra.mxu0 0
    %211 = vmatprep.subr.bf16.mxu0 0
    %212 = vmatpush1.bf16.xpose.msra.mxu0 %v195
    %213 = vmatprep.subr.bf16.mxu0 0
    %214 = vmatpush2.bf16.xpose.msra.mxu0 0
    %215 = vmatprep.subr.bf16.mxu0 0
    %216 = vmatpush2.bf16.xpose.msra.mxu0 0
    %217 = vmatprep.subr.bf16.mxu0 0
    %218 = vmatpush2.bf16.xpose.msra.mxu0 0
    %219 = vmatprep.subr.bf16.mxu0 0
    %220 = vmatpush2.bf16.xpose.msra.mxu0 0
    %221 = vmatprep.subr.bf16.mxu0 0
    %222 = vmatpush2.bf16.xpose.msra.mxu0 0
    %223 = vmatprep.subr.bf16.mxu0 0
    %224 = vmatpush2.bf16.xpose.msra.mxu0 0
    %225 = vmatprep.subr.bf16.mxu0 0
    %226 = vmatpush2.bf16.xpose.msra.mxu0 0
    %227 = vmatprep.subr.bf16.mxu0 0
    %228 = vmatpush2.bf16.xpose.msra.mxu0 0
    %229 = vmatprep.mubr.bf16.mxu0 0
    %230 = vmatmul.mubr.bf16.gmra.mxu0 %v192
    %v231 = vpop.f32.mrf.mxu0
    %v232 = vadd.f32 0.0, %v231
    %v233 = vpop.f32.mrf.mxu0
    %v234 = vpop.f32.mrf.mxu0
    %v235 = vpop.f32.mrf.mxu0
    %236 = vdwg.mxu0
    %237 = vrot.lane.b32.xlu0 %v130, 96
    %v238 = vpop.permute.xlu0 %237
    %v240 = vsel %vm142, %v130, 0
    %v243 = vsel %vm142, %v238, 0
    %245 = vmatprep.subr.bf16.mxu0 0
    %246 = vmatpush1.bf16.xpose.msra.mxu0 0
    %247 = vmatprep.subr.bf16.mxu0 0
    %248 = vmatpush1.bf16.xpose.msra.mxu0 0
    %249 = vmatprep.subr.bf16.mxu0 0
    %250 = vmatpush1.bf16.xpose.msra.mxu0 0
    %251 = vmatprep.subr.bf16.mxu0 0
    %252 = vmatpush1.bf16.xpose.msra.mxu0 0
    %253 = vmatprep.subr.bf16.mxu0 0
    %254 = vmatpush1.bf16.xpose.msra.mxu0 0
    %255 = vmatprep.subr.bf16.mxu0 0
    %256 = vmatpush1.bf16.xpose.msra.mxu0 0
    %257 = vmatprep.subr.bf16.mxu0 0
    %258 = vmatpush1.bf16.xpose.msra.mxu0 0
    %259 = vmatprep.subr.bf16.mxu0 0
    %260 = vmatpush1.bf16.xpose.msra.mxu0 %v243
    %261 = vmatprep.subr.bf16.mxu0 0
    %262 = vmatpush2.bf16.xpose.msra.mxu0 0
    %263 = vmatprep.subr.bf16.mxu0 0
    %264 = vmatpush2.bf16.xpose.msra.mxu0 0
    %265 = vmatprep.subr.bf16.mxu0 0
    %266 = vmatpush2.bf16.xpose.msra.mxu0 0
    %267 = vmatprep.subr.bf16.mxu0 0
    %268 = vmatpush2.bf16.xpose.msra.mxu0 0
    %269 = vmatprep.subr.bf16.mxu0 0
    %270 = vmatpush2.bf16.xpose.msra.mxu0 0
    %271 = vmatprep.subr.bf16.mxu0 0
    %272 = vmatpush2.bf16.xpose.msra.mxu0 0
    %273 = vmatprep.subr.bf16.mxu0 0
    %274 = vmatpush2.bf16.xpose.msra.mxu0 0
    %275 = vmatprep.subr.bf16.mxu0 0
    %276 = vmatpush2.bf16.xpose.msra.mxu0 0
    %277 = vmatprep.mubr.bf16.mxu0 0
    %278 = vmatmul.mubr.bf16.gmra.mxu0 %v240
    %v279 = vpop.f32.mrf.mxu0
    %v280 = vadd.f32 0.0, %v279
    %v281 = vpop.f32.mrf.mxu0
    %v282 = vpop.f32.mrf.mxu0
    %v283 = vpop.f32.mrf.mxu0
    %284 = vdwg.mxu0
    %285 = vrot.lane.b32.xlu0 %v132, 96
    %v286 = vpop.permute.xlu0 %285
    %v288 = vsel %vm142, %v132, 0
    %v291 = vsel %vm142, %v286, 0
    %293 = vmatprep.subr.bf16.mxu0 0
    %294 = vmatpush1.bf16.xpose.msra.mxu0 0
    %295 = vmatprep.subr.bf16.mxu0 0
    %296 = vmatpush1.bf16.xpose.msra.mxu0 0
    %297 = vmatprep.subr.bf16.mxu0 0
    %298 = vmatpush1.bf16.xpose.msra.mxu0 0
    %299 = vmatprep.subr.bf16.mxu0 0
    %300 = vmatpush1.bf16.xpose.msra.mxu0 0
    %301 = vmatprep.subr.bf16.mxu0 0
    %302 = vmatpush1.bf16.xpose.msra.mxu0 0
    %303 = vmatprep.subr.bf16.mxu0 0
    %304 = vmatpush1.bf16.xpose.msra.mxu0 0
    %305 = vmatprep.subr.bf16.mxu0 0
    %306 = vmatpush1.bf16.xpose.msra.mxu0 0
    %307 = vmatprep.subr.bf16.mxu0 0
    %308 = vmatpush1.bf16.xpose.msra.mxu0 %v291
    %309 = vmatprep.subr.bf16.mxu0 0
    %310 = vmatpush2.bf16.xpose.msra.mxu0 0
    %311 = vmatprep.subr.bf16.mxu0 0
    %312 = vmatpush2.bf16.xpose.msra.mxu0 0
    %313 = vmatprep.subr.bf16.mxu0 0
    %314 = vmatpush2.bf16.xpose.msra.mxu0 0
    %315 = vmatprep.subr.bf16.mxu0 0
    %316 = vmatpush2.bf16.xpose.msra.mxu0 0
    %317 = vmatprep.subr.bf16.mxu0 0
    %318 = vmatpush2.bf16.xpose.msra.mxu0 0
    %319 = vmatprep.subr.bf16.mxu0 0
    %320 = vmatpush2.bf16.xpose.msra.mxu0 0
    %321 = vmatprep.subr.bf16.mxu0 0
    %322 = vmatpush2.bf16.xpose.msra.mxu0 0
    %323 = vmatprep.subr.bf16.mxu0 0
    %324 = vmatpush2.bf16.xpose.msra.mxu0 0
    %325 = vmatprep.mubr.bf16.mxu0 0
    %326 = vmatmul.mubr.bf16.gmra.mxu0 %v288
    %v327 = vpop.f32.mrf.mxu0
    %v328 = vadd.f32 0.0, %v327
    %v329 = vpop.f32.mrf.mxu0
    %v330 = vpop.f32.mrf.mxu0
    %v331 = vpop.f32.mrf.mxu0
    %332 = vdwg.mxu0
    %333 = vrot.lane.b32.xlu0 %v133, 96
    %v334 = vpop.permute.xlu0 %333
    %v336 = vsel %vm142, %v133, 0
    %v339 = vsel %vm142, %v334, 0
    %341 = vmatprep.subr.bf16.mxu0 0
    %342 = vmatpush1.bf16.xpose.msra.mxu0 0
    %343 = vmatprep.subr.bf16.mxu0 0
    %344 = vmatpush1.bf16.xpose.msra.mxu0 0
    %345 = vmatprep.subr.bf16.mxu0 0
    %346 = vmatpush1.bf16.xpose.msra.mxu0 0
    %347 = vmatprep.subr.bf16.mxu0 0
    %348 = vmatpush1.bf16.xpose.msra.mxu0 0
    %349 = vmatprep.subr.bf16.mxu0 0
    %350 = vmatpush1.bf16.xpose.msra.mxu0 0
    %351 = vmatprep.subr.bf16.mxu0 0
    %352 = vmatpush1.bf16.xpose.msra.mxu0 0
    %353 = vmatprep.subr.bf16.mxu0 0
    %354 = vmatpush1.bf16.xpose.msra.mxu0 0
    %355 = vmatprep.subr.bf16.mxu0 0
    %356 = vmatpush1.bf16.xpose.msra.mxu0 %v339
    %357 = vmatprep.subr.bf16.mxu0 0
    %358 = vmatpush2.bf16.xpose.msra.mxu0 0
    %359 = vmatprep.subr.bf16.mxu0 0
    %360 = vmatpush2.bf16.xpose.msra.mxu0 0
    %361 = vmatprep.subr.bf16.mxu0 0
    %362 = vmatpush2.bf16.xpose.msra.mxu0 0
    %363 = vmatprep.subr.bf16.mxu0 0
    %364 = vmatpush2.bf16.xpose.msra.mxu0 0
    %365 = vmatprep.subr.bf16.mxu0 0
    %366 = vmatpush2.bf16.xpose.msra.mxu0 0
    %367 = vmatprep.subr.bf16.mxu0 0
    %368 = vmatpush2.bf16.xpose.msra.mxu0 0
    %369 = vmatprep.subr.bf16.mxu0 0
    %370 = vmatpush2.bf16.xpose.msra.mxu0 0
    %371 = vmatprep.subr.bf16.mxu0 0
    %372 = vmatpush2.bf16.xpose.msra.mxu0 0
    %373 = vmatprep.mubr.bf16.mxu0 0
    %374 = vmatmul.mubr.bf16.gmra.mxu0 %v336
    %v375 = vpop.f32.mrf.mxu0
    %v376 = vadd.f32 0.0, %v375
    %v377 = vpop.f32.mrf.mxu0
    %v378 = vpop.f32.mrf.mxu0
    %v379 = vpop.f32.mrf.mxu0
    %380 = vdwg.mxu0
    %381 = vrot.lane.b32.xlu0 %v135, 96
    %v382 = vpop.permute.xlu0 %381
    %v384 = vsel %vm142, %v135, 0
    %v387 = vsel %vm142, %v382, 0
    %389 = vmatprep.subr.bf16.mxu0 0
    %390 = vmatpush1.bf16.xpose.msra.mxu0 0
    %391 = vmatprep.subr.bf16.mxu0 0
    %392 = vmatpush1.bf16.xpose.msra.mxu0 0
    %393 = vmatprep.subr.bf16.mxu0 0
    %394 = vmatpush1.bf16.xpose.msra.mxu0 0
    %395 = vmatprep.subr.bf16.mxu0 0
    %396 = vmatpush1.bf16.xpose.msra.mxu0 0
    %397 = vmatprep.subr.bf16.mxu0 0
    %398 = vmatpush1.bf16.xpose.msra.mxu0 0
    %399 = vmatprep.subr.bf16.mxu0 0
    %400 = vmatpush1.bf16.xpose.msra.mxu0 0
    %401 = vmatprep.subr.bf16.mxu0 0
    %402 = vmatpush1.bf16.xpose.msra.mxu0 0
    %403 = vmatprep.subr.bf16.mxu0 0
    %404 = vmatpush1.bf16.xpose.msra.mxu0 %v387
    %405 = vmatprep.subr.bf16.mxu0 0
    %406 = vmatpush2.bf16.xpose.msra.mxu0 0
    %407 = vmatprep.subr.bf16.mxu0 0
    %408 = vmatpush2.bf16.xpose.msra.mxu0 0
    %409 = vmatprep.subr.bf16.mxu0 0
    %410 = vmatpush2.bf16.xpose.msra.mxu0 0
    %411 = vmatprep.subr.bf16.mxu0 0
    %412 = vmatpush2.bf16.xpose.msra.mxu0 0
    %413 = vmatprep.subr.bf16.mxu0 0
    %414 = vmatpush2.bf16.xpose.msra.mxu0 0
    %415 = vmatprep.subr.bf16.mxu0 0
    %416 = vmatpush2.bf16.xpose.msra.mxu0 0
    %417 = vmatprep.subr.bf16.mxu0 0
    %418 = vmatpush2.bf16.xpose.msra.mxu0 0
    %419 = vmatprep.subr.bf16.mxu0 0
    %420 = vmatpush2.bf16.xpose.msra.mxu0 0
    %421 = vmatprep.mubr.bf16.mxu0 0
    %422 = vmatmul.mubr.bf16.gmra.mxu0 %v384
    %v423 = vpop.f32.mrf.mxu0
    %v424 = vadd.f32 0.0, %v423
    %v425 = vpop.f32.mrf.mxu0
    %v426 = vpop.f32.mrf.mxu0
    %v427 = vpop.f32.mrf.mxu0
    %428 = vdwg.mxu0
    %429 = vrot.lane.b32.xlu0 %v137, 96
    %v430 = vpop.permute.xlu0 %429
    %v432 = vsel %vm142, %v137, 0
    %v435 = vsel %vm142, %v430, 0
    %437 = vmatprep.subr.bf16.mxu0 0
    %438 = vmatpush1.bf16.xpose.msra.mxu0 0
    %439 = vmatprep.subr.bf16.mxu0 0
    %440 = vmatpush1.bf16.xpose.msra.mxu0 0
    %441 = vmatprep.subr.bf16.mxu0 0
    %442 = vmatpush1.bf16.xpose.msra.mxu0 0
    %443 = vmatprep.subr.bf16.mxu0 0
    %444 = vmatpush1.bf16.xpose.msra.mxu0 0
    %445 = vmatprep.subr.bf16.mxu0 0
    %446 = vmatpush1.bf16.xpose.msra.mxu0 0
    %447 = vmatprep.subr.bf16.mxu0 0
    %448 = vmatpush1.bf16.xpose.msra.mxu0 0
    %449 = vmatprep.subr.bf16.mxu0 0
    %450 = vmatpush1.bf16.xpose.msra.mxu0 0
    %451 = vmatprep.subr.bf16.mxu0 0
    %452 = vmatpush1.bf16.xpose.msra.mxu0 %v435
    %453 = vmatprep.subr.bf16.mxu0 0
    %454 = vmatpush2.bf16.xpose.msra.mxu0 0
    %455 = vmatprep.subr.bf16.mxu0 0
    %456 = vmatpush2.bf16.xpose.msra.mxu0 0
    %457 = vmatprep.subr.bf16.mxu0 0
    %458 = vmatpush2.bf16.xpose.msra.mxu0 0
    %459 = vmatprep.subr.bf16.mxu0 0
    %460 = vmatpush2.bf16.xpose.msra.mxu0 0
    %461 = vmatprep.subr.bf16.mxu0 0
    %462 = vmatpush2.bf16.xpose.msra.mxu0 0
    %463 = vmatprep.subr.bf16.mxu0 0
    %464 = vmatpush2.bf16.xpose.msra.mxu0 0
    %465 = vmatprep.subr.bf16.mxu0 0
    %466 = vmatpush2.bf16.xpose.msra.mxu0 0
    %467 = vmatprep.subr.bf16.mxu0 0
    %468 = vmatpush2.bf16.xpose.msra.mxu0 0
    %469 = vmatprep.mubr.bf16.mxu0 0
    %470 = vmatmul.mubr.bf16.gmra.mxu0 %v432
    %v471 = vpop.f32.mrf.mxu0
    %v472 = vadd.f32 0.0, %v471
    %v473 = vpop.f32.mrf.mxu0
    %v474 = vpop.f32.mrf.mxu0
    %v475 = vpop.f32.mrf.mxu0
    %476 = vdwg.mxu0
    %477 = vrot.lane.b32.xlu0 %v139, 96
    %v478 = vpop.permute.xlu0 %477
    %v480 = vsel %vm142, %v139, 0
    %v483 = vsel %vm142, %v478, 0
    %485 = vmatprep.subr.bf16.mxu0 0
    %486 = vmatpush1.bf16.xpose.msra.mxu0 0
    %487 = vmatprep.subr.bf16.mxu0 0
    %488 = vmatpush1.bf16.xpose.msra.mxu0 0
    %489 = vmatprep.subr.bf16.mxu0 0
    %490 = vmatpush1.bf16.xpose.msra.mxu0 0
    %491 = vmatprep.subr.bf16.mxu0 0
    %492 = vmatpush1.bf16.xpose.msra.mxu0 0
    %493 = vmatprep.subr.bf16.mxu0 0
    %494 = vmatpush1.bf16.xpose.msra.mxu0 0
    %495 = vmatprep.subr.bf16.mxu0 0
    %496 = vmatpush1.bf16.xpose.msra.mxu0 0
    %497 = vmatprep.subr.bf16.mxu0 0
    %498 = vmatpush1.bf16.xpose.msra.mxu0 0
    %499 = vmatprep.subr.bf16.mxu0 0
    %500 = vmatpush1.bf16.xpose.msra.mxu0 %v483
    %501 = vmatprep.subr.bf16.mxu0 0
    %502 = vmatpush2.bf16.xpose.msra.mxu0 0
    %503 = vmatprep.subr.bf16.mxu0 0
    %504 = vmatpush2.bf16.xpose.msra.mxu0 0
    %505 = vmatprep.subr.bf16.mxu0 0
    %506 = vmatpush2.bf16.xpose.msra.mxu0 0
    %507 = vmatprep.subr.bf16.mxu0 0
    %508 = vmatpush2.bf16.xpose.msra.mxu0 0
    %509 = vmatprep.subr.bf16.mxu0 0
    %510 = vmatpush2.bf16.xpose.msra.mxu0 0
    %511 = vmatprep.subr.bf16.mxu0 0
    %512 = vmatpush2.bf16.xpose.msra.mxu0 0
    %513 = vmatprep.subr.bf16.mxu0 0
    %514 = vmatpush2.bf16.xpose.msra.mxu0 0
    %515 = vmatprep.subr.bf16.mxu0 0
    %516 = vmatpush2.bf16.xpose.msra.mxu0 0
    %517 = vmatprep.mubr.bf16.mxu0 0
    %518 = vmatmul.mubr.bf16.gmra.mxu0 %v480
    %v519 = vpop.f32.mrf.mxu0
    %v520 = vadd.f32 0.0, %v519
    %v521 = vpop.f32.mrf.mxu0
    %v522 = vpop.f32.mrf.mxu0
    %v523 = vpop.f32.mrf.mxu0
    %524 = vdwg.mxu0
    %v525 = vmul.f32 %v184, 0.35355338
    %v526 = vmul.f32 %v232, 0.35355338
    %v527 = vmul.f32 %v280, 0.35355338
    %v528 = vmul.f32 %v328, 0.35355338
    %v529 = vmul.f32 %v376, 0.35355338
    %v530 = vmul.f32 %v424, 0.35355338
    %v531 = vmul.f32 %v472, 0.35355338
    %v532 = vmul.f32 %v520, 0.35355338
    %v533 = vlaneseq
    %v534 = vshrl.u32 %v533, 7
    %v535 = vlaneseq
    %v536 = vand.u32 %v535, 127
    %vm537 = vcmp.le.s32.totalorder %v536, %v534
    %v538 = vsel %vm537, 1, 0
    %vm539 = vcmp.eq.s32.totalorder %v538, 1
    %v540 = vsel %vm539, %v525, -1e+30
    %v541 = vsel %vm539, %v526, -1e+30
    %v542 = vsel %vm539, %v527, -1e+30
    %v543 = vsel %vm539, %v528, -1e+30
    %v544 = vsel %vm539, %v529, -1e+30
    %v545 = vsel %vm539, %v530, -1e+30
    %v546 = vsel %vm539, %v531, -1e+30
    %v547 = vsel %vm539, %v532, -1e+30
    %v548 = vsel %vm142, %v540, -inf
    %549 = vmax.xlane.f32.xlu0 %v548
    %v550 = vpop.xlane.xlu0 %549
    %v551 = vsel %vm142, %v541, -inf
    %552 = vmax.xlane.f32.xlu0 %v551
    %v553 = vpop.xlane.xlu0 %552
    %v554 = vsel %vm142, %v542, -inf
    %555 = vmax.xlane.f32.xlu0 %v554
    %v556 = vpop.xlane.xlu0 %555
    %v557 = vsel %vm142, %v543, -inf
    %558 = vmax.xlane.f32.xlu0 %v557
    %v559 = vpop.xlane.xlu0 %558
    %v560 = vsel %vm142, %v544, -inf
    %561 = vmax.xlane.f32.xlu0 %v560
    %v562 = vpop.xlane.xlu0 %561
    %v563 = vsel %vm142, %v545, -inf
    %564 = vmax.xlane.f32.xlu0 %v563
    %v565 = vpop.xlane.xlu0 %564
    %v566 = vsel %vm142, %v546, -inf
    %567 = vmax.xlane.f32.xlu0 %v566
    %v568 = vpop.xlane.xlu0 %567
    %v569 = vsel %vm142, %v547, -inf
    %570 = vmax.xlane.f32.xlu0 %v569
    %v571 = vpop.xlane.xlu0 %570
    %v572 = vsub.f32 %v540, %v550
    %v573 = vsub.f32 %v541, %v553
    %v574 = vsub.f32 %v542, %v556
    %v575 = vsub.f32 %v543, %v559
    %v576 = vsub.f32 %v544, %v562
    %v577 = vsub.f32 %v545, %v565
    %v578 = vsub.f32 %v546, %v568
    %v579 = vsub.f32 %v547, %v571
    %v580 = vmul.f32 %v572, 1.442695
    %v581 = vpow.pop %v580
    %v582 = vmul.f32 %v573, 1.442695
    %v583 = vpow.pop %v582
    %v584 = vmul.f32 %v574, 1.442695
    %v585 = vpow.pop %v584
    %v586 = vmul.f32 %v575, 1.442695
    %v587 = vpow.pop %v586
    %v588 = vmul.f32 %v576, 1.442695
    %v589 = vpow.pop %v588
    %v590 = vmul.f32 %v577, 1.442695
    %v591 = vpow.pop %v590
    %v592 = vmul.f32 %v578, 1.442695
    %v593 = vpow.pop %v592
    %v594 = vmul.f32 %v579, 1.442695
    %v595 = vpow.pop %v594
    %v596 = vsel %vm142, %v581, 0.0
    %597 = vadd.xlane.f32.xlu0 %v596
    %v598 = vpop.xlane.xlu0 %597
    %v599 = vsel %vm142, %v583, 0.0
    %600 = vadd.xlane.f32.xlu0 %v599
    %v601 = vpop.xlane.xlu0 %600
    %v602 = vsel %vm142, %v585, 0.0
    %603 = vadd.xlane.f32.xlu0 %v602
    %v604 = vpop.xlane.xlu0 %603
    %v605 = vsel %vm142, %v587, 0.0
    %606 = vadd.xlane.f32.xlu0 %v605
    %v607 = vpop.xlane.xlu0 %606
    %v608 = vsel %vm142, %v589, 0.0
    %609 = vadd.xlane.f32.xlu0 %v608
    %v610 = vpop.xlane.xlu0 %609
    %v611 = vsel %vm142, %v591, 0.0
    %612 = vadd.xlane.f32.xlu0 %v611
    %v613 = vpop.xlane.xlu0 %612
    %v614 = vsel %vm142, %v593, 0.0
    %615 = vadd.xlane.f32.xlu0 %v614
    %v616 = vpop.xlane.xlu0 %615
    %v617 = vsel %vm142, %v595, 0.0
    %618 = vadd.xlane.f32.xlu0 %v617
    %v619 = vpop.xlane.xlu0 %618
    %v620 = vrcp.pop %v598
    %v621 = vrcp.pop %v601
    %v622 = vrcp.pop %v604
    %v623 = vrcp.pop %v607
    %v624 = vrcp.pop %v610
    %v625 = vrcp.pop %v613
    %v626 = vrcp.pop %v616
    %v627 = vrcp.pop %v619
    %v628 = vmul.f32 %v581, %v620
    %v629 = vmul.f32 %v583, %v621
    %v630 = vmul.f32 %v585, %v622
    %v631 = vmul.f32 %v587, %v623
    %v632 = vmul.f32 %v589, %v624
    %v633 = vmul.f32 %v591, %v625
    %v634 = vmul.f32 %v593, %v626
    %v635 = vmul.f32 %v595, %v627
    %v636 = vpack.c.bf16 %v628, %v628
    %v637 = vpack.c.bf16 %v629, %v629
    %v638 = vpack.c.bf16 %v630, %v630
    %v639 = vpack.c.bf16 %v631, %v631
    %v640 = vpack.c.bf16 %v632, %v632
    %v641 = vpack.c.bf16 %v633, %v633
    %v642 = vpack.c.bf16 %v634, %v634
    %v643 = vpack.c.bf16 %v635, %v635
    %644 = vrot.lane.b32.xlu0 %v125, 64
    %v645 = vpop.permute.xlu0 %644
    %v647 = vsel %vm142, %v636, 0
    %vm649 = vcmask 1043456
    %v651 = vsel %vm649, %v645, 0
    %653 = vmatprep.subr.bf16.mxu0 0
    %654 = vmatpush1.bf16.msra.mxu0 0
    %655 = vmatprep.subr.bf16.mxu0 0
    %656 = vmatpush1.bf16.msra.mxu0 0
    %657 = vmatprep.subr.bf16.mxu0 0
    %658 = vmatpush1.bf16.msra.mxu0 0
    %659 = vmatprep.subr.bf16.mxu0 0
    %660 = vmatpush1.bf16.msra.mxu0 0
    %661 = vmatprep.subr.bf16.mxu0 0
    %662 = vmatpush1.bf16.msra.mxu0 0
    %663 = vmatprep.subr.bf16.mxu0 0
    %664 = vmatpush1.bf16.msra.mxu0 0
    %665 = vmatprep.subr.bf16.mxu0 0
    %666 = vmatpush1.bf16.msra.mxu0 0
    %667 = vmatprep.subr.bf16.mxu0 0
    %668 = vmatpush1.bf16.msra.mxu0 %v651
    %669 = vmatprep.subr.bf16.mxu0 0
    %670 = vmatpush2.bf16.msra.mxu0 0
    %671 = vmatprep.subr.bf16.mxu0 0
    %672 = vmatpush2.bf16.msra.mxu0 0
    %673 = vmatprep.subr.bf16.mxu0 0
    %674 = vmatpush2.bf16.msra.mxu0 0
    %675 = vmatprep.subr.bf16.mxu0 0
    %676 = vmatpush2.bf16.msra.mxu0 0
    %677 = vmatprep.subr.bf16.mxu0 0
    %678 = vmatpush2.bf16.msra.mxu0 0
    %679 = vmatprep.subr.bf16.mxu0 0
    %680 = vmatpush2.bf16.msra.mxu0 0
    %681 = vmatprep.subr.bf16.mxu0 0
    %682 = vmatpush2.bf16.msra.mxu0 0
    %683 = vmatprep.subr.bf16.mxu0 0
    %684 = vmatpush2.bf16.msra.mxu0 0
    %685 = vmatprep.mubr.bf16.mxu0 0
    %686 = vmatmul.mubr.bf16.gmra.mxu0 %v647
    %v687 = vpop.f32.mrf.mxu0
    %v688 = vadd.f32 0.0, %v687
    %v689 = vpop.f32.mrf.mxu0
    %v690 = vpop.f32.mrf.mxu0
    %v691 = vpop.f32.mrf.mxu0
    %692 = vdwg.mxu0
    %693 = vrot.lane.b32.xlu0 %v128, 64
    %v694 = vpop.permute.xlu0 %693
    %v696 = vsel %vm142, %v637, 0
    %v699 = vsel %vm649, %v694, 0
    %701 = vmatprep.subr.bf16.mxu0 0
    %702 = vmatpush1.bf16.msra.mxu0 0
    %703 = vmatprep.subr.bf16.mxu0 0
    %704 = vmatpush1.bf16.msra.mxu0 0
    %705 = vmatprep.subr.bf16.mxu0 0
    %706 = vmatpush1.bf16.msra.mxu0 0
    %707 = vmatprep.subr.bf16.mxu0 0
    %708 = vmatpush1.bf16.msra.mxu0 0
    %709 = vmatprep.subr.bf16.mxu0 0
    %710 = vmatpush1.bf16.msra.mxu0 0
    %711 = vmatprep.subr.bf16.mxu0 0
    %712 = vmatpush1.bf16.msra.mxu0 0
    %713 = vmatprep.subr.bf16.mxu0 0
    %714 = vmatpush1.bf16.msra.mxu0 0
    %715 = vmatprep.subr.bf16.mxu0 0
    %716 = vmatpush1.bf16.msra.mxu0 %v699
    %717 = vmatprep.subr.bf16.mxu0 0
    %718 = vmatpush2.bf16.msra.mxu0 0
    %719 = vmatprep.subr.bf16.mxu0 0
    %720 = vmatpush2.bf16.msra.mxu0 0
    %721 = vmatprep.subr.bf16.mxu0 0
    %722 = vmatpush2.bf16.msra.mxu0 0
    %723 = vmatprep.subr.bf16.mxu0 0
    %724 = vmatpush2.bf16.msra.mxu0 0
    %725 = vmatprep.subr.bf16.mxu0 0
    %726 = vmatpush2.bf16.msra.mxu0 0
    %727 = vmatprep.subr.bf16.mxu0 0
    %728 = vmatpush2.bf16.msra.mxu0 0
    %729 = vmatprep.subr.bf16.mxu0 0
    %730 = vmatpush2.bf16.msra.mxu0 0
    %731 = vmatprep.subr.bf16.mxu0 0
    %732 = vmatpush2.bf16.msra.mxu0 0
    %733 = vmatprep.mubr.bf16.mxu0 0
    %734 = vmatmul.mubr.bf16.gmra.mxu0 %v696
    %v735 = vpop.f32.mrf.mxu0
    %v736 = vadd.f32 0.0, %v735
    %v737 = vpop.f32.mrf.mxu0
    %v738 = vpop.f32.mrf.mxu0
    %v739 = vpop.f32.mrf.mxu0
    %740 = vdwg.mxu0
    %741 = vrot.lane.b32.xlu0 %v130, 64
    %v742 = vpop.permute.xlu0 %741
    %v744 = vsel %vm142, %v638, 0
    %v747 = vsel %vm649, %v742, 0
    %749 = vmatprep.subr.bf16.mxu0 0
    %750 = vmatpush1.bf16.msra.mxu0 0
    %751 = vmatprep.subr.bf16.mxu0 0
    %752 = vmatpush1.bf16.msra.mxu0 0
    %753 = vmatprep.subr.bf16.mxu0 0
    %754 = vmatpush1.bf16.msra.mxu0 0
    %755 = vmatprep.subr.bf16.mxu0 0
    %756 = vmatpush1.bf16.msra.mxu0 0
    %757 = vmatprep.subr.bf16.mxu0 0
    %758 = vmatpush1.bf16.msra.mxu0 0
    %759 = vmatprep.subr.bf16.mxu0 0
    %760 = vmatpush1.bf16.msra.mxu0 0
    %761 = vmatprep.subr.bf16.mxu0 0
    %762 = vmatpush1.bf16.msra.mxu0 0
    %763 = vmatprep.subr.bf16.mxu0 0
    %764 = vmatpush1.bf16.msra.mxu0 %v747
    %765 = vmatprep.subr.bf16.mxu0 0
    %766 = vmatpush2.bf16.msra.mxu0 0
    %767 = vmatprep.subr.bf16.mxu0 0
    %768 = vmatpush2.bf16.msra.mxu0 0
    %769 = vmatprep.subr.bf16.mxu0 0
    %770 = vmatpush2.bf16.msra.mxu0 0
    %771 = vmatprep.subr.bf16.mxu0 0
    %772 = vmatpush2.bf16.msra.mxu0 0
    %773 = vmatprep.subr.bf16.mxu0 0
    %774 = vmatpush2.bf16.msra.mxu0 0
    %775 = vmatprep.subr.bf16.mxu0 0
    %776 = vmatpush2.bf16.msra.mxu0 0
    %777 = vmatprep.subr.bf16.mxu0 0
    %778 = vmatpush2.bf16.msra.mxu0 0
    %779 = vmatprep.subr.bf16.mxu0 0
    %780 = vmatpush2.bf16.msra.mxu0 0
    %781 = vmatprep.mubr.bf16.mxu0 0
    %782 = vmatmul.mubr.bf16.gmra.mxu0 %v744
    %v783 = vpop.f32.mrf.mxu0
    %v784 = vadd.f32 0.0, %v783
    %v785 = vpop.f32.mrf.mxu0
    %v786 = vpop.f32.mrf.mxu0
    %v787 = vpop.f32.mrf.mxu0
    %788 = vdwg.mxu0
    %789 = vrot.lane.b32.xlu0 %v132, 64
    %v790 = vpop.permute.xlu0 %789
    %v792 = vsel %vm142, %v639, 0
    %v795 = vsel %vm649, %v790, 0
    %797 = vmatprep.subr.bf16.mxu0 0
    %798 = vmatpush1.bf16.msra.mxu0 0
    %799 = vmatprep.subr.bf16.mxu0 0
    %800 = vmatpush1.bf16.msra.mxu0 0
    %801 = vmatprep.subr.bf16.mxu0 0
    %802 = vmatpush1.bf16.msra.mxu0 0
    %803 = vmatprep.subr.bf16.mxu0 0
    %804 = vmatpush1.bf16.msra.mxu0 0
    %805 = vmatprep.subr.bf16.mxu0 0
    %806 = vmatpush1.bf16.msra.mxu0 0
    %807 = vmatprep.subr.bf16.mxu0 0
    %808 = vmatpush1.bf16.msra.mxu0 0
    %809 = vmatprep.subr.bf16.mxu0 0
    %810 = vmatpush1.bf16.msra.mxu0 0
    %811 = vmatprep.subr.bf16.mxu0 0
    %812 = vmatpush1.bf16.msra.mxu0 %v795
    %813 = vmatprep.subr.bf16.mxu0 0
    %814 = vmatpush2.bf16.msra.mxu0 0
    %815 = vmatprep.subr.bf16.mxu0 0
    %816 = vmatpush2.bf16.msra.mxu0 0
    %817 = vmatprep.subr.bf16.mxu0 0
    %818 = vmatpush2.bf16.msra.mxu0 0
    %819 = vmatprep.subr.bf16.mxu0 0
    %820 = vmatpush2.bf16.msra.mxu0 0
    %821 = vmatprep.subr.bf16.mxu0 0
    %822 = vmatpush2.bf16.msra.mxu0 0
    %823 = vmatprep.subr.bf16.mxu0 0
    %824 = vmatpush2.bf16.msra.mxu0 0
    %825 = vmatprep.subr.bf16.mxu0 0
    %826 = vmatpush2.bf16.msra.mxu0 0
    %827 = vmatprep.subr.bf16.mxu0 0
    %828 = vmatpush2.bf16.msra.mxu0 0
    %829 = vmatprep.mubr.bf16.mxu0 0
    %830 = vmatmul.mubr.bf16.gmra.mxu0 %v792
    %v831 = vpop.f32.mrf.mxu0
    %v832 = vadd.f32 0.0, %v831
    %v833 = vpop.f32.mrf.mxu0
    %v834 = vpop.f32.mrf.mxu0
    %v835 = vpop.f32.mrf.mxu0
    %836 = vdwg.mxu0
    %837 = vrot.lane.b32.xlu0 %v133, 64
    %v838 = vpop.permute.xlu0 %837
    %v840 = vsel %vm142, %v640, 0
    %v843 = vsel %vm649, %v838, 0
    %845 = vmatprep.subr.bf16.mxu0 0
    %846 = vmatpush1.bf16.msra.mxu0 0
    %847 = vmatprep.subr.bf16.mxu0 0
    %848 = vmatpush1.bf16.msra.mxu0 0
    %849 = vmatprep.subr.bf16.mxu0 0
    %850 = vmatpush1.bf16.msra.mxu0 0
    %851 = vmatprep.subr.bf16.mxu0 0
    %852 = vmatpush1.bf16.msra.mxu0 0
    %853 = vmatprep.subr.bf16.mxu0 0
    %854 = vmatpush1.bf16.msra.mxu0 0
    %855 = vmatprep.subr.bf16.mxu0 0
    %856 = vmatpush1.bf16.msra.mxu0 0
    %857 = vmatprep.subr.bf16.mxu0 0
    %858 = vmatpush1.bf16.msra.mxu0 0
    %859 = vmatprep.subr.bf16.mxu0 0
    %860 = vmatpush1.bf16.msra.mxu0 %v843
    %861 = vmatprep.subr.bf16.mxu0 0
    %862 = vmatpush2.bf16.msra.mxu0 0
    %863 = vmatprep.subr.bf16.mxu0 0
    %864 = vmatpush2.bf16.msra.mxu0 0
    %865 = vmatprep.subr.bf16.mxu0 0
    %866 = vmatpush2.bf16.msra.mxu0 0
    %867 = vmatprep.subr.bf16.mxu0 0
    %868 = vmatpush2.bf16.msra.mxu0 0
    %869 = vmatprep.subr.bf16.mxu0 0
    %870 = vmatpush2.bf16.msra.mxu0 0
    %871 = vmatprep.subr.bf16.mxu0 0
    %872 = vmatpush2.bf16.msra.mxu0 0
    %873 = vmatprep.subr.bf16.mxu0 0
    %874 = vmatpush2.bf16.msra.mxu0 0
    %875 = vmatprep.subr.bf16.mxu0 0
    %876 = vmatpush2.bf16.msra.mxu0 0
    %877 = vmatprep.mubr.bf16.mxu0 0
    %878 = vmatmul.mubr.bf16.gmra.mxu0 %v840
    %v879 = vpop.f32.mrf.mxu0
    %v880 = vadd.f32 0.0, %v879
    %v881 = vpop.f32.mrf.mxu0
    %v882 = vpop.f32.mrf.mxu0
    %v883 = vpop.f32.mrf.mxu0
    %884 = vdwg.mxu0
    %885 = vrot.lane.b32.xlu0 %v135, 64
    %v886 = vpop.permute.xlu0 %885
    %v888 = vsel %vm142, %v641, 0
    %v891 = vsel %vm649, %v886, 0
    %893 = vmatprep.subr.bf16.mxu0 0
    %894 = vmatpush1.bf16.msra.mxu0 0
    %895 = vmatprep.subr.bf16.mxu0 0
    %896 = vmatpush1.bf16.msra.mxu0 0
    %897 = vmatprep.subr.bf16.mxu0 0
    %898 = vmatpush1.bf16.msra.mxu0 0
    %899 = vmatprep.subr.bf16.mxu0 0
    %900 = vmatpush1.bf16.msra.mxu0 0
    %901 = vmatprep.subr.bf16.mxu0 0
    %902 = vmatpush1.bf16.msra.mxu0 0
    %903 = vmatprep.subr.bf16.mxu0 0
    %904 = vmatpush1.bf16.msra.mxu0 0
    %905 = vmatprep.subr.bf16.mxu0 0
    %906 = vmatpush1.bf16.msra.mxu0 0
    %907 = vmatprep.subr.bf16.mxu0 0
    %908 = vmatpush1.bf16.msra.mxu0 %v891
    %909 = vmatprep.subr.bf16.mxu0 0
    %910 = vmatpush2.bf16.msra.mxu0 0
    %911 = vmatprep.subr.bf16.mxu0 0
    %912 = vmatpush2.bf16.msra.mxu0 0
    %913 = vmatprep.subr.bf16.mxu0 0
    %914 = vmatpush2.bf16.msra.mxu0 0
    %915 = vmatprep.subr.bf16.mxu0 0
    %916 = vmatpush2.bf16.msra.mxu0 0
    %917 = vmatprep.subr.bf16.mxu0 0
    %918 = vmatpush2.bf16.msra.mxu0 0
    %919 = vmatprep.subr.bf16.mxu0 0
    %920 = vmatpush2.bf16.msra.mxu0 0
    %921 = vmatprep.subr.bf16.mxu0 0
    %922 = vmatpush2.bf16.msra.mxu0 0
    %923 = vmatprep.subr.bf16.mxu0 0
    %924 = vmatpush2.bf16.msra.mxu0 0
    %925 = vmatprep.mubr.bf16.mxu0 0
    %926 = vmatmul.mubr.bf16.gmra.mxu0 %v888
    %v927 = vpop.f32.mrf.mxu0
    %v928 = vadd.f32 0.0, %v927
    %v929 = vpop.f32.mrf.mxu0
    %v930 = vpop.f32.mrf.mxu0
    %v931 = vpop.f32.mrf.mxu0
    %932 = vdwg.mxu0
    %933 = vrot.lane.b32.xlu0 %v137, 64
    %v934 = vpop.permute.xlu0 %933
    %v936 = vsel %vm142, %v642, 0
    %v939 = vsel %vm649, %v934, 0
    %941 = vmatprep.subr.bf16.mxu0 0
    %942 = vmatpush1.bf16.msra.mxu0 0
    %943 = vmatprep.subr.bf16.mxu0 0
    %944 = vmatpush1.bf16.msra.mxu0 0
    %945 = vmatprep.subr.bf16.mxu0 0
    %946 = vmatpush1.bf16.msra.mxu0 0
    %947 = vmatprep.subr.bf16.mxu0 0
    %948 = vmatpush1.bf16.msra.mxu0 0
    %949 = vmatprep.subr.bf16.mxu0 0
    %950 = vmatpush1.bf16.msra.mxu0 0
    %951 = vmatprep.subr.bf16.mxu0 0
    %952 = vmatpush1.bf16.msra.mxu0 0
    %953 = vmatprep.subr.bf16.mxu0 0
    %954 = vmatpush1.bf16.msra.mxu0 0
    %955 = vmatprep.subr.bf16.mxu0 0
    %956 = vmatpush1.bf16.msra.mxu0 %v939
    %957 = vmatprep.subr.bf16.mxu0 0
    %958 = vmatpush2.bf16.msra.mxu0 0
    %959 = vmatprep.subr.bf16.mxu0 0
    %960 = vmatpush2.bf16.msra.mxu0 0
    %961 = vmatprep.subr.bf16.mxu0 0
    %962 = vmatpush2.bf16.msra.mxu0 0
    %963 = vmatprep.subr.bf16.mxu0 0
    %964 = vmatpush2.bf16.msra.mxu0 0
    %965 = vmatprep.subr.bf16.mxu0 0
    %966 = vmatpush2.bf16.msra.mxu0 0
    %967 = vmatprep.subr.bf16.mxu0 0
    %968 = vmatpush2.bf16.msra.mxu0 0
    %969 = vmatprep.subr.bf16.mxu0 0
    %970 = vmatpush2.bf16.msra.mxu0 0
    %971 = vmatprep.subr.bf16.mxu0 0
    %972 = vmatpush2.bf16.msra.mxu0 0
    %973 = vmatprep.mubr.bf16.mxu0 0
    %974 = vmatmul.mubr.bf16.gmra.mxu0 %v936
    %v975 = vpop.f32.mrf.mxu0
    %v976 = vadd.f32 0.0, %v975
    %v977 = vpop.f32.mrf.mxu0
    %v978 = vpop.f32.mrf.mxu0
    %v979 = vpop.f32.mrf.mxu0
    %980 = vdwg.mxu0
    %981 = vrot.lane.b32.xlu0 %v139, 64
    %v982 = vpop.permute.xlu0 %981
    %v984 = vsel %vm142, %v643, 0
    %v987 = vsel %vm649, %v982, 0
    %989 = vmatprep.subr.bf16.mxu0 0
    %990 = vmatpush1.bf16.msra.mxu0 0
    %991 = vmatprep.subr.bf16.mxu0 0
    %992 = vmatpush1.bf16.msra.mxu0 0
    %993 = vmatprep.subr.bf16.mxu0 0
    %994 = vmatpush1.bf16.msra.mxu0 0
    %995 = vmatprep.subr.bf16.mxu0 0
    %996 = vmatpush1.bf16.msra.mxu0 0
    %997 = vmatprep.subr.bf16.mxu0 0
    %998 = vmatpush1.bf16.msra.mxu0 0
    %999 = vmatprep.subr.bf16.mxu0 0
    %1000 = vmatpush1.bf16.msra.mxu0 0
    %1001 = vmatprep.subr.bf16.mxu0 0
    %1002 = vmatpush1.bf16.msra.mxu0 0
    %1003 = vmatprep.subr.bf16.mxu0 0
    %1004 = vmatpush1.bf16.msra.mxu0 %v987
    %1005 = vmatprep.subr.bf16.mxu0 0
    %1006 = vmatpush2.bf16.msra.mxu0 0
    %1007 = vmatprep.subr.bf16.mxu0 0
    %1008 = vmatpush2.bf16.msra.mxu0 0
    %1009 = vmatprep.subr.bf16.mxu0 0
    %1010 = vmatpush2.bf16.msra.mxu0 0
    %1011 = vmatprep.subr.bf16.mxu0 0
    %1012 = vmatpush2.bf16.msra.mxu0 0
    %1013 = vmatprep.subr.bf16.mxu0 0
    %1014 = vmatpush2.bf16.msra.mxu0 0
    %1015 = vmatprep.subr.bf16.mxu0 0
    %1016 = vmatpush2.bf16.msra.mxu0 0
    %1017 = vmatprep.subr.bf16.mxu0 0
    %1018 = vmatpush2.bf16.msra.mxu0 0
    %1019 = vmatprep.subr.bf16.mxu0 0
    %1020 = vmatpush2.bf16.msra.mxu0 0
    %1021 = vmatprep.mubr.bf16.mxu0 0
    %1022 = vmatmul.mubr.bf16.gmra.mxu0 %v984
    %v1023 = vpop.f32.mrf.mxu0
    %v1024 = vadd.f32 0.0, %v1023
    %v1025 = vpop.f32.mrf.mxu0
    %v1026 = vpop.f32.mrf.mxu0
    %v1027 = vpop.f32.mrf.mxu0
    %1028 = vdwg.mxu0
    %1030 = vrot.lane.b32.xlu0 %v736, 8
    %v1031 = vpop.permute.xlu0 %1030
    %1034 = vrot.lane.b32.xlu0 %v784, 16
    %v1035 = vpop.permute.xlu0 %1034
    %1038 = vrot.lane.b32.xlu0 %v832, 24
    %v1039 = vpop.permute.xlu0 %1038
    %v1041 = vsel %vm142, %v688, %v1031
    %vm1042 = vcmask 130048
    %v1043 = vsel %vm1042, %v1041, %v1035
    %vm1044 = vcmask 195584
    %v1045 = vsel %vm1044, %v1043, %v1039
    %1047 = vrot.lane.b32.xlu0 %v928, 8
    %v1048 = vpop.permute.xlu0 %1047
    %1051 = vrot.lane.b32.xlu0 %v976, 16
    %v1052 = vpop.permute.xlu0 %1051
    %1055 = vrot.lane.b32.xlu0 %v1024, 24
    %v1056 = vpop.permute.xlu0 %1055
    %v1058 = vsel %vm142, %v880, %v1048
    %v1059 = vsel %vm1042, %v1058, %v1052
    %v1060 = vsel %vm1044, %v1059, %v1056
    %v1061 = vpack.c.bf16 %v1060, %v1045
    %v1062 = vld [vmem:[#allocation7] sm:$0xf]
    %v1063 = vld [vmem:[#allocation7 + $0x4] sm:$0xf]
    %v1064 = vld [vmem:[#allocation7 + $0x8] sm:$0xf]
    %v1065 = vld [vmem:[#allocation7 + $0xc] sm:$0xf]
    %v1070 = vunpack.c.l.b16 %v1062
    %v1071 = vunpack.c.l.b16 %v1063
    %v1072 = vunpack.c.l.b16 %v1064
    %v1073 = vunpack.c.l.b16 %v1065
    %v1074 = vpack.c.b16 %v1071, %v1070
    %v1075 = vpack.c.b16 %v1073, %v1072
    %v1079 = vsel %vm80, %v1061, 0
    %1081 = vmatprep.subr.bf16.mxu0 0
    %1082 = vmatpush1.bf16.msra.mxu0 0
    %1083 = vmatprep.subr.bf16.mxu0 0
    %1084 = vmatpush1.bf16.msra.mxu0 0
    %1085 = vmatprep.subr.bf16.mxu0 0
    %1086 = vmatpush1.bf16.msra.mxu0 0
    %1087 = vmatprep.subr.bf16.mxu0 0
    %1088 = vmatpush1.bf16.msra.mxu0 0
    %1089 = vmatprep.subr.bf16.mxu0 0
    %1090 = vmatpush1.bf16.msra.mxu0 0
    %1091 = vmatprep.subr.bf16.mxu0 0
    %1092 = vmatpush1.bf16.msra.mxu0 0
    %1093 = vmatprep.subr.bf16.mxu0 0
    %1094 = vmatpush1.bf16.msra.mxu0 %v1075
    %1095 = vmatprep.subr.bf16.mxu0 0
    %1096 = vmatpush1.bf16.msra.mxu0 %v1074
    %1097 = vmatprep.subr.bf16.mxu0 0
    %1098 = vmatpush2.bf16.msra.mxu0 0
    %1099 = vmatprep.subr.bf16.mxu0 0
    %1100 = vmatpush2.bf16.msra.mxu0 0
    %1101 = vmatprep.subr.bf16.mxu0 0
    %1102 = vmatpush2.bf16.msra.mxu0 0
    %1103 = vmatprep.subr.bf16.mxu0 0
    %1104 = vmatpush2.bf16.msra.mxu0 0
    %1105 = vmatprep.subr.bf16.mxu0 0
    %1106 = vmatpush2.bf16.msra.mxu0 0
    %1107 = vmatprep.subr.bf16.mxu0 0
    %1108 = vmatpush2.bf16.msra.mxu0 0
    %1109 = vmatprep.subr.bf16.mxu0 0
    %1110 = vmatpush2.bf16.msra.mxu0 0
    %1111 = vmatprep.subr.bf16.mxu0 0
    %1112 = vmatpush2.bf16.msra.mxu0 0
    %1113 = vmatprep.mubr.bf16.mxu0 0
    %1114 = vmatmul.mubr.bf16.gmra.mxu0 %v1079
    %v1115 = vpop.f32.mrf.mxu0
    %v1116 = vadd.f32 0.0, %v1115
    %v1117 = vpop.f32.mrf.mxu0
    %v1118 = vpop.f32.mrf.mxu0
    %v1119 = vadd.f32 0.0, %v1118
    %v1120 = vpop.f32.mrf.mxu0
    %1121 = vdwg.mxu0
    %1122 = vst.msk [vmem:[#allocation8] sm:$0xff] %vm80, %v1116
    %1123 = vst.msk [vmem:[#allocation8 + $0x8] sm:$0xff] %vm80, %v1119
    // Predicated region
    $region26: #{tpu_custom_call.1} parent=1 // pred_check
      _
    $region27: #{tpu_custom_call.1} parent=1 // pred_check_branch
      %1125 = sbr.rel (0) target = $region29
    $region28: #{tpu_custom_call.1} parent=1 // pred_region
      %s1127 = ssub.s32 256, 256
      %1128 = vsyncadd [#allocation4], %s1127
      %s1129 = sshll.u32 [#allocation8], 4
      %s1130 = int_to_ptr.vmem [resolvable:$true] %s1129
      %1135 = dma.vmem_to_hbm [thread:$0]  %s1130, 256, %s3, [#allocation4], 128, 128, 8
    $region29: #{tpu_custom_call.1} parent=1 // pred_fallthru
      _
    // Predicated region
    $region30: #{tpu_custom_call.1} parent=1 // pred_check
      _
    $region31: #{tpu_custom_call.1} parent=1 // pred_check_branch
      %1137 = sbr.rel (0) target = $region33
    $region32: #{tpu_custom_call.1} parent=1 // pred_region
      %1138 = dma.done [#allocation4], 256
    $region33: #{tpu_custom_call.1} parent=1 // pred_fallthru
      _
    %1139 = vsyncpa [#allocation3], 1
    %1140 = vsyncpa [#allocation6], 1
    %1141 = vsyncpa [#allocation4], 1

</llo_original>
